<compile_context>
chip_gen: v7x
topology: tpu7x:2x2x1
jax: 0.10.0
libtpu: 0.0.40
codegen_flags: <defaults>
</compile_context>

<pallas_src>
from functools import partial

import jax
import jax.numpy as jnp
from jax.experimental import pallas as pl
from jax.experimental.pallas import tpu as pltpu

EPS = 1e-5
NEG_SLOPE = 1e-2

_VMEM_LIMIT_BYTES = 48 * 1024 * 1024   # explicit scoped VMEM, headroom on v7x (64 MiB)
_TILE_BUDGET_BYTES = 20 * 1024 * 1024  # target double-buffered working set per step
_TILE_CAP = 4096


def _conv_stats_kernel(p_ref, w_ref, b_ref, y_ref, sum_ref, sq_ref):
    """Pass 1: conv-as-matmul + bias, plus fused single-sweep sum / sum-of-squares.

    p_ref:   (1, K, tS)      bf16 patches (K on sublanes, spatial on lanes)
    w_ref:   (Cout, K)       bf16 conv weight (resident: constant index_map)
    b_ref:   (Cout, 1)       f32 conv bias
    y_ref:   (1, Cout, tS)   f32 conv output tile (lane-dense store)
    sum_ref: (1, 1, Cout, 1) f32 per-tile sum(y)  over the spatial tile
    sq_ref:  (1, 1, Cout, 1) f32 per-tile sum(y*y)
    """
    y = jnp.dot(w_ref[...], p_ref[0],
                preferred_element_type=jnp.float32) + b_ref[...]   # (Cout, tS) f32
    y_ref[0] = y
    # One sweep for both moments; var is finalized as E[y^2] - mean^2 in pass 2.
    sum_ref[0, 0] = jnp.sum(y, axis=1, keepdims=True)
    sq_ref[0, 0] = jnp.sum(y * y, axis=1, keepdims=True)


def _norm_act_kernel(y_ref, psum_ref, psq_ref, g_ref, b_ref, o_ref, *, inv_s):
    """Pass 2: in-kernel instance-norm finalize + folded affine + LeakyReLU(0.01).

    y_ref:    (1, Cout, tS)   f32 conv output tile
    psum_ref: (1, T, Cout, 1) f32 per-tile sums   (resident per n)
    psq_ref:  (1, T, Cout, 1) f32 per-tile sumsq  (resident per n)
    g_ref:    (Cout, 1)       f32 InstanceNorm gamma (resident)
    b_ref:    (Cout, 1)       f32 InstanceNorm beta  (resident)
    o_ref:    (1, Cout, tS)   f32 output tile (lane-dense store)
    """
    # Tiny stateless finalize (keeps both grid axes "parallel"): everything
    # stays in the channels-on-sublanes layout, so no in-kernel transposes.
    s_tot = jnp.sum(psum_ref[0], axis=0)                   # (Cout, 1)
    sq_tot = jnp.sum(psq_ref[0], axis=0)                   # (Cout, 1)
    mean = s_tot * inv_s
    var = jnp.maximum(sq_tot * inv_s - mean * mean, 0.0)   # biased var, clamp >= 0
    scale = g_ref[...] * jax.lax.rsqrt(var + EPS)          # gamma / sqrt(var+eps)
    shift = b_ref[...] - mean * scale                      # beta - mean*scale
    z = y_ref[0] * scale + shift                           # (Cout, tS), lane bcast
    o_ref[0] = jnp.where(z >= 0, z, NEG_SLOPE * z)


def _choose_tile_s(S, K, Cout):
    """Largest lane-dense (multiple-of-128) divisor of S within the VMEM budget."""
    best = None
    t = 128
    while t <= min(S, _TILE_CAP):
        if S % t == 0:
            # patches (bf16, x2 buffers) + y tiles (f32, pass1 out / pass2 in+out) + weights
            use = 2 * (K * t * 2) + 4 * (Cout * t * 4) + 2 * (Cout * K * 2)
            if use <= _TILE_BUDGET_BYTES:
                best = t
        t += 128
    if best is None:
        # TODO(synk): ragged S (no multiple-of-128 divisor) would need masked
        # tiles; fall back to a single full-extent block along S.
        best = S
    return best


def down_or_up_sample(x, conv_w, conv_b, in_gamma, in_beta, tile_s=None):
    """x: (N, Cin, D, H, W) f32.  Returns (N, Cout, D/2, H/2, W/2) f32."""
    N, Cin, D, H, W = x.shape
    Cout = conv_w.shape[0]
    assert D % 2 == 0 and H % 2 == 0 and W % 2 == 0
    D2, H2, W2 = D // 2, H // 2, W // 2
    S = D2 * H2 * W2
    K = Cin * 8

    if tile_s is None:
        tile_s = _choose_tile_s(S, K, Cout)
    assert S % tile_s == 0 and (tile_s % 128 == 0 or tile_s == S)
    T = S // tile_s

    # im2col for non-overlapping 2x2x2 patches, produced directly in the
    # kernel layout (N, K, S) and fused by XLA with the bf16 downcast.
    # K index order = (ci, kd, kh, kw), matching conv_w.reshape(Cout, K).
    x8 = x.reshape(N, Cin, D2, 2, H2, 2, W2, 2)
    patches = jnp.transpose(x8, (0, 1, 3, 5, 7, 2, 4, 6)) \
                 .reshape(N, K, S).astype(jnp.bfloat16)

    w_mat = conv_w.reshape(Cout, K).astype(jnp.bfloat16)   # no transpose needed
    b_col = conv_b.reshape(Cout, 1).astype(jnp.float32)
    g_col = in_gamma.reshape(Cout, 1).astype(jnp.float32)
    be_col = in_beta.reshape(Cout, 1).astype(jnp.float32)

    cparams = pltpu.CompilerParams(
        dimension_semantics=("parallel", "parallel"),
        vmem_limit_bytes=_VMEM_LIMIT_BYTES)

    # ---- Pass 1: conv (bf16 MXU matmul) + bias + per-tile moment partials ----
    y, psum, psq = pl.pallas_call(
        _conv_stats_kernel,
        out_shape=(
            jax.ShapeDtypeStruct((N, Cout, S), jnp.float32),
            jax.ShapeDtypeStruct((N, T, Cout, 1), jnp.float32),
            jax.ShapeDtypeStruct((N, T, Cout, 1), jnp.float32),
        ),
        grid=(N, T),
        in_specs=[
            pl.BlockSpec((1, K, tile_s), lambda n, t: (n, 0, t)),
            pl.BlockSpec((Cout, K), lambda n, t: (0, 0)),     # resident weights
            pl.BlockSpec((Cout, 1), lambda n, t: (0, 0)),     # resident bias
        ],
        out_specs=(
            pl.BlockSpec((1, Cout, tile_s), lambda n, t: (n, 0, t)),
            pl.BlockSpec((1, 1, Cout, 1), lambda n, t: (n, t, 0, 0)),
            pl.BlockSpec((1, 1, Cout, 1), lambda n, t: (n, t, 0, 0)),
        ),
        compiler_params=cparams,
    )(patches, w_mat, b_col)

    # ---- Pass 2: in-kernel stats finalize + folded affine + LeakyReLU --------
    out = pl.pallas_call(
        partial(_norm_act_kernel, inv_s=1.0 / float(S)),
        out_shape=jax.ShapeDtypeStruct((N, Cout, S), jnp.float32),
        grid=(N, T),
        in_specs=[
            pl.BlockSpec((1, Cout, tile_s), lambda n, t: (n, 0, t)),
            pl.BlockSpec((1, T, Cout, 1), lambda n, t: (n, 0, 0, 0)),  # resident per-n sums
            pl.BlockSpec((1, T, Cout, 1), lambda n, t: (n, 0, 0, 0)),  # resident per-n sumsq
            pl.BlockSpec((Cout, 1), lambda n, t: (0, 0)),              # resident gamma
            pl.BlockSpec((Cout, 1), lambda n, t: (0, 0)),              # resident beta
        ],
        out_specs=pl.BlockSpec((1, Cout, tile_s), lambda n, t: (n, 0, t)),
        compiler_params=cparams,
    )(y, psum, psq, g_col, be_col)

    # (N, Cout, S) -> NCDHW is a FREE reshape (no transpose, no extra HBM pass).
    return out.reshape(N, Cout, D2, H2, W2)


def _reference(x, conv_w, conv_b, in_gamma, in_beta):
    # Pure-JAX f32 reference for correctness checking.
    y = jax.lax.conv_general_dilated(
        x, conv_w, window_strides=(2, 2, 2), padding="VALID",
        dimension_numbers=("NCDHW", "OIDHW", "NCDHW"))
    y = y + conv_b.reshape(1, -1, 1, 1, 1)
    mean = jnp.mean(y, axis=(2, 3, 4), keepdims=True)
    var = jnp.mean((y - mean) ** 2, axis=(2, 3, 4), keepdims=True)
    yn = (y - mean) * jax.lax.rsqrt(var + EPS)
    yn = yn * in_gamma.reshape(1, -1, 1, 1, 1) + in_beta.reshape(1, -1, 1, 1, 1)
    return jnp.where(yn >= 0, yn, NEG_SLOPE * yn)


if __name__ == "__main__":
    key = jax.random.PRNGKey(0)
    k_x, k_w, k_b, k_g, k_be = jax.random.split(key, 5)

    N, Cin, Cout = 2, 4, 8
    D = H = W = 16                      # S = 512 -> lane-dense tiles
    x = jax.random.normal(k_x, (N, Cin, D, H, W), dtype=jnp.float32)
    conv_w = jax.random.normal(k_w, (Cout, Cin, 2, 2, 2), dtype=jnp.float32) * 0.1
    conv_b = jax.random.normal(k_b, (Cout,), dtype=jnp.float32) * 0.1
    in_gamma = 1.0 + 0.1 * jax.random.normal(k_g, (Cout,), dtype=jnp.float32)
    in_beta = 0.1 * jax.random.normal(k_be, (Cout,), dtype=jnp.float32)

    ref = _reference(x, conv_w, conv_b, in_gamma, in_beta)

    # Auto-chosen tile (single S tile here) and a forced multi-tile run that
    # exercises the S-tiling + partial-statistics (in-kernel) reduction path.
    out = jax.block_until_ready(
        down_or_up_sample(x, conv_w, conv_b, in_gamma, in_beta))
    out_tiled = jax.block_until_ready(
        down_or_up_sample(x, conv_w, conv_b, in_gamma, in_beta, tile_s=128))

    assert out.shape == (N, Cout, D // 2, H // 2, W // 2)
    # bf16 MXU inputs (per perf guidance) vs. the pure-f32 reference.
    assert jnp.allclose(out, ref, rtol=2e-2, atol=2e-2)
    assert jnp.allclose(out_tiled, ref, rtol=2e-2, atol=2e-2)

    print("KERNEL_OK")
</pallas_src>

<mosaic_0001>
module attributes {stable_mosaic.version = 11 : i64} {
  func.func @_conv_stats_kernel(%arg0: i32, %arg1: i32, %arg2: memref<1x32x512xbf16, #tpu.memory_space<vmem>>, %arg3: memref<8x32xbf16, #tpu.memory_space<vmem>>, %arg4: memref<8x1xf32, #tpu.memory_space<vmem>>, %arg5: memref<1x8x512xf32, #tpu.memory_space<vmem>>, %arg6: memref<1x1x8x1xf32, #tpu.memory_space<vmem>>, %arg7: memref<1x1x8x1xf32, #tpu.memory_space<vmem>>) attributes {dimension_semantics = [#tpu.dimension_semantics<parallel>, #tpu.dimension_semantics<parallel>], iteration_bounds = array<i64: 2, 1>, scalar_prefetch = 0 : i64, scratch_operands = 0 : i64, tpu.core_type = #tpu.core_type<tc>, window_params = [{transform_indices = @transform_0, window_bounds = array<i64: 1, 32, 512>}, {pipeline_mode = #tpu.pipeline_mode<synchronous>, transform_indices = @transform_1, window_bounds = array<i64: 8, 32>}, {pipeline_mode = #tpu.pipeline_mode<synchronous>, transform_indices = @transform_2, window_bounds = array<i64: 8, 1>}, {transform_indices = @transform_3, window_bounds = array<i64: 1, 8, 512>}, {transform_indices = @transform_4, window_bounds = array<i64: 1, 1, 8, 1>}, {transform_indices = @transform_5, window_bounds = array<i64: 1, 1, 8, 1>}]} {
    %c0 = arith.constant 0 : index
    %c0_0 = arith.constant 0 : index
    %0 = vector.load %arg3[%c0, %c0_0] : memref<8x32xbf16, #tpu.memory_space<vmem>>, vector<8x32xbf16>
    %c0_1 = arith.constant 0 : index
    %c0_2 = arith.constant 0 : index
    %c0_3 = arith.constant 0 : index
    %1 = vector.load %arg2[%c0_1, %c0_2, %c0_3] : memref<1x32x512xbf16, #tpu.memory_space<vmem>>, vector<1x32x512xbf16>
    %2 = vector.shape_cast %1 : vector<1x32x512xbf16> to vector<32x512xbf16>
    %cst = arith.constant dense<0.000000e+00> : vector<8x512xf32>
    %3 = tpu.matmul %0, %2, %cst {dimension_numbers = #tpu.dot_dimension_numbers<[1], [0], [0], [1], [0, 0, 1, 1], [], []>} : vector<8x32xbf16>, vector<32x512xbf16>, vector<8x512xf32> -> vector<8x512xf32>
    %c0_4 = arith.constant 0 : index
    %c0_5 = arith.constant 0 : index
    %4 = vector.load %arg4[%c0_4, %c0_5] : memref<8x1xf32, #tpu.memory_space<vmem>>, vector<8x1xf32>
    %5 = vector.broadcast %4 : vector<8x1xf32> to vector<8x512xf32>
    %6 = arith.addf %3, %5 : vector<8x512xf32>
    %c0_6 = arith.constant 0 : index
    %c0_7 = arith.constant 0 : index
    %c0_8 = arith.constant 0 : index
    %7 = vector.load %arg5[%c0_6, %c0_7, %c0_8] : memref<1x8x512xf32, #tpu.memory_space<vmem>>, vector<1x8x512xf32>
    %8 = vector.shape_cast %7 : vector<1x8x512xf32> to vector<8x512xf32>
    %9 = vector.shape_cast %6 : vector<8x512xf32> to vector<1x8x512xf32>
    tpu.vector_store %arg5[%c0_6, %c0_7, %c0_8], %9 {strides = array<i32>} : memref<1x8x512xf32, #tpu.memory_space<vmem>>, vector<1x8x512xf32>,
    %cst_9 = arith.constant dense<0.000000e+00> : vector<8xf32>
    %10 = vector.multi_reduction <add>, %6, %cst_9 [1] : vector<8x512xf32> to vector<8xf32>
    %11 = vector.shape_cast %10 : vector<8xf32> to vector<8x1xf32>
    %c0_10 = arith.constant 0 : index
    %c0_11 = arith.constant 0 : index
    %c0_12 = arith.constant 0 : index
    %c0_13 = arith.constant 0 : index
    %12 = vector.load %arg6[%c0_10, %c0_11, %c0_12, %c0_13] : memref<1x1x8x1xf32, #tpu.memory_space<vmem>>, vector<1x1x8x1xf32>
    %13 = vector.shape_cast %12 : vector<1x1x8x1xf32> to vector<8x1xf32>
    %14 = vector.shape_cast %11 : vector<8x1xf32> to vector<1x1x8x1xf32>
    tpu.vector_store %arg6[%c0_10, %c0_11, %c0_12, %c0_13], %14 {strides = array<i32>} : memref<1x1x8x1xf32, #tpu.memory_space<vmem>>, vector<1x1x8x1xf32>,
    %15 = arith.mulf %6, %6 : vector<8x512xf32>
    %cst_14 = arith.constant dense<0.000000e+00> : vector<8xf32>
    %16 = vector.multi_reduction <add>, %15, %cst_14 [1] : vector<8x512xf32> to vector<8xf32>
    %17 = vector.shape_cast %16 : vector<8xf32> to vector<8x1xf32>
    %c0_15 = arith.constant 0 : index
    %c0_16 = arith.constant 0 : index
    %c0_17 = arith.constant 0 : index
    %c0_18 = arith.constant 0 : index
    %18 = vector.load %arg7[%c0_15, %c0_16, %c0_17, %c0_18] : memref<1x1x8x1xf32, #tpu.memory_space<vmem>>, vector<1x1x8x1xf32>
    %19 = vector.shape_cast %18 : vector<1x1x8x1xf32> to vector<8x1xf32>
    %20 = vector.shape_cast %17 : vector<8x1xf32> to vector<1x1x8x1xf32>
    tpu.vector_store %arg7[%c0_15, %c0_16, %c0_17, %c0_18], %20 {strides = array<i32>} : memref<1x1x8x1xf32, #tpu.memory_space<vmem>>, vector<1x1x8x1xf32>,
    return
  }
  func.func @transform_0(%arg0: i32, %arg1: i32) -> (i32, i32, i32) {
    %c0_i32 = arith.constant 0 : i32
    %c0_i32_0 = arith.constant 0 : i32
    return %arg0, %c0_i32, %arg1 : i32, i32, i32
  }
  func.func @transform_1(%arg0: i32, %arg1: i32) -> (i32, i32) {
    %c0_i32 = arith.constant 0 : i32
    %c0_i32_0 = arith.constant 0 : i32
    %c0_i32_1 = arith.constant 0 : i32
    return %c0_i32, %c0_i32_0 : i32, i32
  }
  func.func @transform_2(%arg0: i32, %arg1: i32) -> (i32, i32) {
    %c0_i32 = arith.constant 0 : i32
    %c0_i32_0 = arith.constant 0 : i32
    %c0_i32_1 = arith.constant 0 : i32
    return %c0_i32, %c0_i32_0 : i32, i32
  }
  func.func @transform_3(%arg0: i32, %arg1: i32) -> (i32, i32, i32) {
    %c0_i32 = arith.constant 0 : i32
    %c0_i32_0 = arith.constant 0 : i32
    return %arg0, %c0_i32, %arg1 : i32, i32, i32
  }
  func.func @transform_4(%arg0: i32, %arg1: i32) -> (i32, i32, i32, i32) {
    %c0_i32 = arith.constant 0 : i32
    %c0_i32_0 = arith.constant 0 : i32
    %c0_i32_1 = arith.constant 0 : i32
    return %arg0, %arg1, %c0_i32, %c0_i32_0 : i32, i32, i32, i32
  }
  func.func @transform_5(%arg0: i32, %arg1: i32) -> (i32, i32, i32, i32) {
    %c0_i32 = arith.constant 0 : i32
    %c0_i32_0 = arith.constant 0 : i32
    %c0_i32_1 = arith.constant 0 : i32
    return %arg0, %arg1, %c0_i32, %c0_i32_0 : i32, i32, i32, i32
  }
}

</mosaic_0001>

<llo_original>
// kernel: tpu_custom_call.1
$region0: #{tpu_custom_call.1}
  #allocation0 [shape = 'u32[]', space=smem, size = 0x4, offset = 0x4, fixed_abs, tag = 'smem constant byte address 0x4 - core index']
  #allocation1 [shape = 'u32[144,128]{1,0:T(1,128)}', space=vmem, size = 0x12000, scoped, tag = 'internal scratch']
  %s0 = inlined_call_operand.hbm [shape: bf16[2,32,512], index: 0, kind: input, shape index: {}]
  %s1 = inlined_call_operand.vmem [shape: bf16[8,32], index: 1, kind: input, shape index: {}]
  %s2 = inlined_call_operand.vmem [shape: f32[8,1], index: 2, kind: input, shape index: {}]
  %s3 = inlined_call_operand.hbm [shape: f32[2,8,512], index: 3, kind: output, shape index: {0}]
  %s4 = inlined_call_operand.vmem [shape: f32[2,1,8,1], index: 4, kind: output, shape index: {1}]
  %s5 = inlined_call_operand.vmem [shape: f32[2,1,8,1], index: 5, kind: output, shape index: {2}]
  %6 = xla_tuple %s3, %s4, %s5
  %s7 = sld [smem:[#allocation0]]
  $region65: #{tpu_custom_call.1} parent=0
    _
  %s9 = ssub.s32 1, %s7
  %s10 = scalar_select 0, %s9, %s7
  $region1: #{tpu_custom_call.1} parent=0
    #allocation2 [shape = 'u8[65536]{0}', space=vmem, size = 0x10000, scoped, tag = 'input window, operand 0']
    #allocation3 [shape = 's32[2]{0}', space=sflag, size = 0x8, scoped, tag = 'scoped memory for tpu_custom_call.1']
    #allocation4 [shape = 's32[2]{0}', space=sflag, size = 0x8, scoped, tag = 'scoped memory for tpu_custom_call.1']
    #allocation5 [shape = 'u8[32768]{0}', space=vmem, size = 0x8000, scoped, tag = 'output window, operand 0']
    %11 = vsyncpa [#allocation3], 0
    %s12 = scalar_lea.sflag [#allocation3], 1
    %13 = vsyncpa %s12, 0
    %14 = vsyncpa [#allocation4], 0
    %s15 = scalar_lea.sflag [#allocation4], 1
    %16 = vsyncpa %s15, 0
    loop: start=0, step=1, limit=4
    $region2: #{tpu_custom_call.1} parent=1 // loop_pre_header
      _
    $region3: #{tpu_custom_call.1} parent=1 // loop_header
      %s18 = sphi 0, %s22
      %p19 = scmp.ge.s32.totalorder %s18, 4
      %s25 = sphi 0, %s37
      %s26 = sphi 0, %s33
      %s27 = sphi 0, %s25
      %s28 = sphi 0, %s26
      %s29 = sphi 0, %s27
      %s30 = sphi 0, %s28
      %s42 = sphi 0, %s44
      %s45 = sphi 0, %s42
      %s46 = sphi 0, %s45
      %s62 = sphi 0, %s46
      %s66 = sphi 0, %s66
      %s68 = sphi 0, %s66
      %s69 = sphi 0, %s68
      %s83 = sphi 0, %s69
      %s87 = sphi 0, %s87
      %s89 = sphi 0, %s87
      %s90 = sphi 0, %s89
      %s104 = sphi 0, %s90
      %s112 = sphi 0, %s114
      %s115 = sphi 0, %s112
      %s116 = sphi 0, %s115
      %s132 = sphi 0, %s116
      %s140 = sphi 0, %s142
      %s143 = sphi 0, %s140
      %s144 = sphi 0, %s143
      %s160 = sphi 0, %s144
      %s168 = sphi 0, %s170
      %s171 = sphi 0, %s168
      %s172 = sphi 0, %s171
      %s188 = sphi 0, %s172
    $region4: #{tpu_custom_call.1} parent=1 // loop_header_branch
      %21 = sbr.rel (%p19) target = $region8
    $region5: #{tpu_custom_call.1} parent=1 // loop_body
      %s23 = ssub.s32 %s18, 1
      %s24 = ssub.s32 %s18, 2
      %s31 = sadd.s32 1, %s26
      %p32 = scmp.ge.s32.totalorder %s31, 1
      %s33 = scalar_select %p32, 0, %s31
      %s34 = sadd.s32 1, %s25
      %s35 = scalar_select %p32, %s34, %s25
      %p36 = scmp.ge.s32.totalorder %s35, 2
      %s37 = scalar_select %p36, 0, %s35
      %s38 = ssub.s32 %s25, %s37
      %s39 = ssub.s32 %s26, %s33
      %s40 = sor.u32 %s38, %s39
      %p41 = scmp.eq.s32.totalorder %s40, 0
      %s43 = sadd.s32 %s42, 1
      %s44 = scalar_select %p41, %s42, %s43
      %p47 = pneg %p41
      %p48 = scmp.eq.s32.totalorder %s18, 1
      %p49 = por %p47, %p48
      %p50 = scmp.ne.s32.totalorder %s42, %s45
      %p51 = scmp.eq.s32.totalorder %s18, 0
      %p52 = por %p50, %p51
      %p53 = scmp.ne.s32.totalorder %s42, %s45
      %p54 = scmp.eq.s32.totalorder %s23, 1
      %p55 = por %p53, %p54
      %p56 = scmp.ne.s32.totalorder %s45, %s46
      %p57 = scmp.eq.s32.totalorder %s23, 0
      %p58 = por %p56, %p57
      %p59 = scmp.ne.s32.totalorder %s45, %s46
      %p60 = scmp.eq.s32.totalorder %s24, 1
      %p61 = por %p59, %p60
      %p63 = scmp.ne.s32.totalorder %s46, %s62
      %p64 = scmp.eq.s32.totalorder %s24, 0
      %p65 = por %p63, %p64
      %s67 = sadd.s32 %s66, 1
      %p70 = scmp.eq.s32.totalorder %s18, 1
      %p71 = scmp.ne.s32.totalorder %s66, %s68
      %p72 = scmp.eq.s32.totalorder %s18, 0
      %p73 = por %p71, %p72
      %p74 = scmp.ne.s32.totalorder %s66, %s68
      %p75 = scmp.eq.s32.totalorder %s23, 1
      %p76 = por %p74, %p75
      %p77 = scmp.ne.s32.totalorder %s68, %s69
      %p78 = scmp.eq.s32.totalorder %s23, 0
      %p79 = por %p77, %p78
      %p80 = scmp.ne.s32.totalorder %s68, %s69
      %p81 = scmp.eq.s32.totalorder %s24, 1
      %p82 = por %p80, %p81
      %p84 = scmp.ne.s32.totalorder %s69, %s83
      %p85 = scmp.eq.s32.totalorder %s24, 0
      %p86 = por %p84, %p85
      %s88 = sadd.s32 %s87, 1
      %p91 = scmp.eq.s32.totalorder %s18, 1
      %p92 = scmp.ne.s32.totalorder %s87, %s89
      %p93 = scmp.eq.s32.totalorder %s18, 0
      %p94 = por %p92, %p93
      %p95 = scmp.ne.s32.totalorder %s87, %s89
      %p96 = scmp.eq.s32.totalorder %s23, 1
      %p97 = por %p95, %p96
      %p98 = scmp.ne.s32.totalorder %s89, %s90
      %p99 = scmp.eq.s32.totalorder %s23, 0
      %p100 = por %p98, %p99
      %p101 = scmp.ne.s32.totalorder %s89, %s90
      %p102 = scmp.eq.s32.totalorder %s24, 1
      %p103 = por %p101, %p102
      %p105 = scmp.ne.s32.totalorder %s90, %s104
      %p106 = scmp.eq.s32.totalorder %s24, 0
      %p107 = por %p105, %p106
      %s108 = ssub.s32 %s25, %s37
      %s109 = ssub.s32 %s26, %s33
      %s110 = sor.u32 %s108, %s109
      %p111 = scmp.eq.s32.totalorder %s110, 0
      %s113 = sadd.s32 %s112, 1
      %s114 = scalar_select %p111, %s112, %s113
      %p117 = pneg %p111
      %p118 = scmp.eq.s32.totalorder %s18, 1
      %p119 = por %p117, %p118
      %p120 = scmp.ne.s32.totalorder %s112, %s115
      %p121 = scmp.eq.s32.totalorder %s18, 0
      %p122 = por %p120, %p121
      %p123 = scmp.ne.s32.totalorder %s112, %s115
      %p124 = scmp.eq.s32.totalorder %s23, 1
      %p125 = por %p123, %p124
      %p126 = scmp.ne.s32.totalorder %s115, %s116
      %p127 = scmp.eq.s32.totalorder %s23, 0
      %p128 = por %p126, %p127
      %p129 = scmp.ne.s32.totalorder %s115, %s116
      %p130 = scmp.eq.s32.totalorder %s24, 1
      %p131 = por %p129, %p130
      %p133 = scmp.ne.s32.totalorder %s116, %s132
      %p134 = scmp.eq.s32.totalorder %s24, 0
      %p135 = por %p133, %p134
      %s136 = ssub.s32 %s25, %s37
      %s137 = ssub.s32 %s26, %s33
      %s138 = sor.u32 %s136, %s137
      %p139 = scmp.eq.s32.totalorder %s138, 0
      %s141 = sadd.s32 %s140, 1
      %s142 = scalar_select %p139, %s140, %s141
      %p145 = pneg %p139
      %p146 = scmp.eq.s32.totalorder %s18, 1
      %p147 = por %p145, %p146
      %p148 = scmp.ne.s32.totalorder %s140, %s143
      %p149 = scmp.eq.s32.totalorder %s18, 0
      %p150 = por %p148, %p149
      %p151 = scmp.ne.s32.totalorder %s140, %s143
      %p152 = scmp.eq.s32.totalorder %s23, 1
      %p153 = por %p151, %p152
      %p154 = scmp.ne.s32.totalorder %s143, %s144
      %p155 = scmp.eq.s32.totalorder %s23, 0
      %p156 = por %p154, %p155
      %p157 = scmp.ne.s32.totalorder %s143, %s144
      %p158 = scmp.eq.s32.totalorder %s24, 1
      %p159 = por %p157, %p158
      %p161 = scmp.ne.s32.totalorder %s144, %s160
      %p162 = scmp.eq.s32.totalorder %s24, 0
      %p163 = por %p161, %p162
      %s164 = ssub.s32 %s25, %s37
      %s165 = ssub.s32 %s26, %s33
      %s166 = sor.u32 %s164, %s165
      %p167 = scmp.eq.s32.totalorder %s166, 0
      %s169 = sadd.s32 %s168, 1
      %s170 = scalar_select %p167, %s168, %s169
      %p173 = pneg %p167
      %p174 = scmp.eq.s32.totalorder %s18, 1
      %p175 = por %p173, %p174
      %p176 = scmp.ne.s32.totalorder %s168, %s171
      %p177 = scmp.eq.s32.totalorder %s18, 0
      %p178 = por %p176, %p177
      %p179 = scmp.ne.s32.totalorder %s168, %s171
      %p180 = scmp.eq.s32.totalorder %s23, 1
      %p181 = por %p179, %p180
      %p182 = scmp.ne.s32.totalorder %s171, %s172
      %p183 = scmp.eq.s32.totalorder %s23, 0
      %p184 = por %p182, %p183
      %p185 = scmp.ne.s32.totalorder %s171, %s172
      %p186 = scmp.eq.s32.totalorder %s24, 1
      %p187 = por %p185, %p186
      %p189 = scmp.ne.s32.totalorder %s172, %s188
      %p190 = scmp.eq.s32.totalorder %s24, 0
      %p191 = por %p189, %p190
      %p192 = scmp.le.s32.totalorder 1, %s18
      %p193 = scmp.lt.s32.totalorder %s18, 3
      %p194 = pnand %p192, %p193
      %p195 = pneg %p194
      // Predicated region
      $region9: #{tpu_custom_call.1} parent=5 // pred_check
        _
      $region10: #{tpu_custom_call.1} parent=5 // pred_check_branch
        %197 = sbr.rel (%p194) target = $region12
      $region11: #{tpu_custom_call.1} parent=5 // pred_region
        %s198 = ssub.s32 %s18, 1
        // Predicated region
        $region13: #{tpu_custom_call.1} parent=11 // pred_check
          %p199 = pneg %p79
        $region14: #{tpu_custom_call.1} parent=11 // pred_check_branch
          %201 = sbr.rel (%p199) target = $region16
        $region15: #{tpu_custom_call.1} parent=11 // pred_region
          _
        $region16: #{tpu_custom_call.1} parent=11 // pred_fallthru
          _
        // Predicated region
        $region17: #{tpu_custom_call.1} parent=11 // pred_check
          %p202 = pneg %p100
        $region18: #{tpu_custom_call.1} parent=11 // pred_check_branch
          %204 = sbr.rel (%p202) target = $region20
        $region19: #{tpu_custom_call.1} parent=11 // pred_region
          _
        $region20: #{tpu_custom_call.1} parent=11 // pred_fallthru
          _
      $region12: #{tpu_custom_call.1} parent=5 // pred_fallthru
        _
      %p205 = scmp.lt.s32.totalorder %s18, 2
      // Predicated region
      $region21: #{tpu_custom_call.1} parent=5 // pred_check
        %p206 = pneg %p205
      $region22: #{tpu_custom_call.1} parent=5 // pred_check_branch
        %208 = sbr.rel (%p206) target = $region24
      $region23: #{tpu_custom_call.1} parent=5 // pred_region
        // Predicated region
        $region25: #{tpu_custom_call.1} parent=23 // pred_check
          %p209 = pneg %p52
        $region26: #{tpu_custom_call.1} parent=23 // pred_check_branch
          %211 = sbr.rel (%p209) target = $region28
        $region27: #{tpu_custom_call.1} parent=23 // pred_region
          %s212 = sand.u32 %s42, 1
          %s213 = scalar_lea.sflag [#allocation3], %s212
          %s214 = sand.u32 %s42, 1
          %s215 = smul.addr %s214, 64
          %s216 = scalar_lea.vmem [#allocation2], %s215
          %s217 = smul.u32 4, %s26
          %s219 = ssub.s32 1024, 1024
          %220 = vsyncadd %s213, %s219
          %s221 = smul.addr %s25, 16
          %s222 = sadd.s32 %s217, %s221
          %s223 = smul.addr %s222, 64
          %s224 = scalar_lea.hbm %s0, %s223
          %s225 = sshll.u32 %s216, 4
          %s226 = int_to_ptr.vmem [resolvable:$true] %s225
          %231 = dma.hbm_to_vmem [thread:$0]  %s224, 1024, %s226, %s213, 256, 256, 16
        $region28: #{tpu_custom_call.1} parent=23 // pred_fallthru
          _
      $region24: #{tpu_custom_call.1} parent=5 // pred_fallthru
        _
      %p232 = scmp.le.s32.totalorder 1, %s18
      %p233 = scmp.lt.s32.totalorder %s18, 3
      %p234 = pnand %p232, %p233
      %p235 = pneg %p234
      // Predicated region
      $region29: #{tpu_custom_call.1} parent=5 // pred_check
        _
      $region30: #{tpu_custom_call.1} parent=5 // pred_check_branch
        %237 = sbr.rel (%p234) target = $region32
      $region31: #{tpu_custom_call.1} parent=5 // pred_region
        %s238 = ssub.s32 %s18, 1
        %s239 = sand.u32 %s45, 1
        %s240 = scalar_lea.sflag [#allocation3], %s239
        %s241 = sand.u32 %s45, 1
        %s242 = smul.addr %s241, 64
        %s243 = scalar_lea.vmem [#allocation2], %s242
        // Predicated region
        $region33: #{tpu_custom_call.1} parent=31 // pred_check
          %p244 = pneg %p58
        $region34: #{tpu_custom_call.1} parent=31 // pred_check_branch
          %246 = sbr.rel (%p244) target = $region36
        $region35: #{tpu_custom_call.1} parent=31 // pred_region
          %247 = dma.done %s240, 1024
        $region36: #{tpu_custom_call.1} parent=31 // pred_fallthru
          _
        %s248 = sand.u32 %s45, 1
        %s249 = scalar_lea.sflag [#allocation3], %s248
        %s250 = sand.u32 %s45, 1
        %s251 = smul.addr %s250, 64
        %s252 = scalar_lea.vmem [#allocation2], %s251
        %p253 = pneg %p58
        %p254 = pneg %p55
        %p255 = pneg %p79
        %p256 = pneg %p76
        %p257 = pneg %p100
        %p258 = pneg %p97
        %p259 = pneg %p128
        %p260 = pneg %p125
        %s261 = sand.u32 %s115, 1
        %s262 = scalar_lea.sflag [#allocation4], %s261
        %s263 = sand.u32 %s115, 1
        %s264 = smul.addr %s263, 32
        %s265 = scalar_lea.vmem [#allocation5], %s264
        %p266 = pneg %p156
        %p267 = pneg %p153
        %p268 = scmp.lt.s32.totalorder %s27, 1
        %s269 = scalar_select %p268, %s27, 1
        %p270 = scmp.lt.s32.totalorder %s28, 0
        %s271 = scalar_select %p270, %s28, 0
        %s272 = sadd.s32 %s271, %s269
        %s273 = smul.addr %s272, 8
        %s274 = scalar_lea.vmem %s4, %s273
        %p275 = pneg %p184
        %p276 = pneg %p181
        %p277 = scmp.lt.s32.totalorder %s27, 1
        %s278 = scalar_select %p277, %s27, 1
        %p279 = scmp.lt.s32.totalorder %s28, 0
        %s280 = scalar_select %p279, %s28, 0
        %s281 = sadd.s32 %s280, %s278
        %s282 = smul.addr %s281, 8
        %s283 = scalar_lea.vmem %s5, %s282
        %s284 = smul.u32 4, %s28
        %s285 = smul.u32 4, %s28
        %p286 = scmp.lt.s32.totalorder %s27, 1
        %s287 = scalar_select %p286, %s27, 1
        %p288 = scmp.lt.s32.totalorder %s28, 0
        %s289 = scalar_select %p288, %s28, 0
        %s290 = sadd.s32 %s289, %s287
        %s291 = smul.addr %s290, 8
        %s292 = scalar_lea.vmem %s4, %s291
        %p293 = scmp.lt.s32.totalorder %s27, 1
        %s294 = scalar_select %p293, %s27, 1
        %p295 = scmp.lt.s32.totalorder %s28, 0
        %s296 = scalar_select %p295, %s28, 0
        %s297 = sadd.s32 %s296, %s294
        %s298 = smul.addr %s297, 8
        %s299 = scalar_lea.vmem %s5, %s298
        %v301 = vld [vmem:[%s1] sm:$0xf]
        %v302 = vld [vmem:[%s243] sm:$0xff]
        %v303 = vld [vmem:[%s243 + $0x8] sm:$0xff]
        %v304 = vld [vmem:[%s243 + $0x10] sm:$0xff]
        %v305 = vld [vmem:[%s243 + $0x18] sm:$0xff]
        %v306 = vld [vmem:[%s243 + $0x20] sm:$0xff]
        %v307 = vld [vmem:[%s243 + $0x28] sm:$0xff]
        %v308 = vld [vmem:[%s243 + $0x30] sm:$0xff]
        %v309 = vld [vmem:[%s243 + $0x38] sm:$0xff]
        %v310 = vld [vmem:[%s2] sm:$0xff]
        %312 = vset.pattern.permute.xlu0 0
        %313 = vperm.xlu0 %312, %v310
        %v314 = vpop.permute.xlu0 %313
        %v324 = vunpack.c.l.b16 %v302
        %v325 = vunpack.c.h.b16 %v302
        %v326 = vunpack.c.l.b16 %v303
        %v327 = vunpack.c.h.b16 %v303
        %v328 = vunpack.c.l.b16 %v304
        %v329 = vunpack.c.h.b16 %v304
        %v330 = vunpack.c.l.b16 %v305
        %v331 = vunpack.c.h.b16 %v305
        %v332 = vunpack.c.l.b16 %v306
        %v333 = vunpack.c.h.b16 %v306
        %v334 = vunpack.c.l.b16 %v307
        %v335 = vunpack.c.h.b16 %v307
        %v336 = vunpack.c.l.b16 %v308
        %v337 = vunpack.c.h.b16 %v308
        %v338 = vunpack.c.l.b16 %v309
        %v339 = vunpack.c.h.b16 %v309
        %v340 = vpack.c.b16 %v328, %v324
        %v341 = vpack.c.b16 %v329, %v325
        %v342 = vpack.c.b16 %v330, %v326
        %v343 = vpack.c.b16 %v331, %v327
        %v344 = vpack.c.b16 %v336, %v332
        %v345 = vpack.c.b16 %v337, %v333
        %v346 = vpack.c.b16 %v338, %v334
        %v347 = vpack.c.b16 %v339, %v335
        %vm356 = vcmask 261120
        %v358 = vsel %vm356, %v301, 0
        %360 = vmatprep.subr.bf16.mxu0 %v341
        %361 = vmatpush1.bf16.msra.mxu0 %v340
        %362 = vmatprep.subr.bf16.mxu0 %v345
        %363 = vmatpush1.bf16.msra.mxu0 %v344
        %364 = vmatprep.subr.bf16.mxu0 0
        %365 = vmatpush1.bf16.msra.mxu0 0
        %366 = vmatprep.subr.bf16.mxu0 0
        %367 = vmatpush1.bf16.msra.mxu0 0
        %368 = vmatprep.subr.bf16.mxu0 0
        %369 = vmatpush1.bf16.msra.mxu0 0
        %370 = vmatprep.subr.bf16.mxu0 0
        %371 = vmatpush1.bf16.msra.mxu0 0
        %372 = vmatprep.subr.bf16.mxu0 0
        %373 = vmatpush1.bf16.msra.mxu0 0
        %374 = vmatprep.subr.bf16.mxu0 0
        %375 = vmatpush1.bf16.msra.mxu0 0
        %376 = vmatprep.subr.bf16.mxu0 0
        %377 = vmatpush1.bf16.msra.mxu0 0
        %378 = vmatprep.subr.bf16.mxu0 0
        %379 = vmatpush1.bf16.msra.mxu0 0
        %380 = vmatprep.subr.bf16.mxu0 0
        %381 = vmatpush1.bf16.msra.mxu0 0
        %382 = vmatprep.subr.bf16.mxu0 0
        %383 = vmatpush1.bf16.msra.mxu0 0
        %384 = vmatprep.subr.bf16.mxu0 0
        %385 = vmatpush1.bf16.msra.mxu0 0
        %386 = vmatprep.subr.bf16.mxu0 0
        %387 = vmatpush1.bf16.msra.mxu0 0
        %388 = vmatprep.subr.bf16.mxu0 0
        %389 = vmatpush1.bf16.msra.mxu0 0
        %390 = vmatprep.subr.bf16.mxu0 0
        %391 = vmatpush1.bf16.msra.mxu0 0
        %392 = vmatprep.mubr.bf16.mxu0 0
        %393 = vmatmul.mubr.bf16.gmra.mrb[0].mxu0 %v358
        %v394 = vpop.f32.mrb[0].mxu0
        %v395 = vadd.f32 %v314, %v394
        %v396 = vpop.f32.mrb[0].mxu0
        %v397 = vadd.f32 %v314, %v396
        %v398 = vpop.f32.mrb[0].mxu0
        %v399 = vpop.f32.mrb[0].mxu0
        %400 = vdwg.mxu0
        %401 = vmatprep.subr.bf16.mxu0 %v343
        %402 = vmatpush1.bf16.msra.mxu0 %v342
        %403 = vmatprep.subr.bf16.mxu0 %v347
        %404 = vmatpush1.bf16.msra.mxu0 %v346
        %405 = vmatprep.subr.bf16.mxu0 0
        %406 = vmatpush1.bf16.msra.mxu0 0
        %407 = vmatprep.subr.bf16.mxu0 0
        %408 = vmatpush1.bf16.msra.mxu0 0
        %409 = vmatprep.subr.bf16.mxu0 0
        %410 = vmatpush1.bf16.msra.mxu0 0
        %411 = vmatprep.subr.bf16.mxu0 0
        %412 = vmatpush1.bf16.msra.mxu0 0
        %413 = vmatprep.subr.bf16.mxu0 0
        %414 = vmatpush1.bf16.msra.mxu0 0
        %415 = vmatprep.subr.bf16.mxu0 0
        %416 = vmatpush1.bf16.msra.mxu0 0
        %417 = vmatprep.subr.bf16.mxu0 0
        %418 = vmatpush1.bf16.msra.mxu0 0
        %419 = vmatprep.subr.bf16.mxu0 0
        %420 = vmatpush1.bf16.msra.mxu0 0
        %421 = vmatprep.subr.bf16.mxu0 0
        %422 = vmatpush1.bf16.msra.mxu0 0
        %423 = vmatprep.subr.bf16.mxu0 0
        %424 = vmatpush1.bf16.msra.mxu0 0
        %425 = vmatprep.subr.bf16.mxu0 0
        %426 = vmatpush1.bf16.msra.mxu0 0
        %427 = vmatprep.subr.bf16.mxu0 0
        %428 = vmatpush1.bf16.msra.mxu0 0
        %429 = vmatprep.subr.bf16.mxu0 0
        %430 = vmatpush1.bf16.msra.mxu0 0
        %431 = vmatprep.subr.bf16.mxu0 0
        %432 = vmatpush1.bf16.msra.mxu0 0
        %433 = vmatprep.mubr.bf16.mxu0 0
        %434 = vmatmul.mubr.bf16.gmra.mrb[0].mxu0 %v358
        %v435 = vpop.f32.mrb[0].mxu0
        %v436 = vadd.f32 %v314, %v435
        %v437 = vpop.f32.mrb[0].mxu0
        %v438 = vadd.f32 %v314, %v437
        %v439 = vpop.f32.mrb[0].mxu0
        %v440 = vpop.f32.mrb[0].mxu0
        %441 = vdwg.mxu0
        %442 = vst [vmem:[%s265] sm:$0xff] %v395
        %443 = vst [vmem:[%s265 + $0x8] sm:$0xff] %v397
        %444 = vst [vmem:[%s265 + $0x10] sm:$0xff] %v436
        %445 = vst [vmem:[%s265 + $0x18] sm:$0xff] %v438
        %v446 = vadd.f32 %v395, %v397
        %v447 = vadd.f32 %v446, %v436
        %v448 = vadd.f32 %v447, %v438
        %449 = vadd.xlane.f32.xlu0 %v448
        %v450 = vpop.xlane.xlu0 %449
        %vm451 = vcmask 7168
        %452 = vst.msk [vmem:[%s292] sm:$0xff] %vm451, %v450
        %v453 = vmul.f32 %v395, %v395
        %v454 = vmul.f32 %v397, %v397
        %v455 = vmul.f32 %v436, %v436
        %v456 = vmul.f32 %v438, %v438
        %v457 = vadd.f32 %v453, %v454
        %v458 = vadd.f32 %v457, %v455
        %v459 = vadd.f32 %v458, %v456
        %460 = vadd.xlane.f32.xlu0 %v459
        %v461 = vpop.xlane.xlu0 %460
        %462 = vst.msk [vmem:[%s299] sm:$0xff] %vm451, %v461
        %s463 = sand.u32 %s115, 1
        %s464 = scalar_lea.sflag [#allocation4], %s463
        %s465 = sand.u32 %s115, 1
        %s466 = smul.addr %s465, 32
        %s467 = scalar_lea.vmem [#allocation5], %s466
        %p468 = scmp.lt.s32.totalorder %s27, 1
        %s469 = scalar_select %p468, %s27, 1
        %p470 = scmp.lt.s32.totalorder %s28, 0
        %s471 = scalar_select %p470, %s28, 0
        %s472 = sadd.s32 %s471, %s469
        %s473 = smul.addr %s472, 8
        %s474 = scalar_lea.vmem %s4, %s473
        %p475 = scmp.lt.s32.totalorder %s27, 1
        %s476 = scalar_select %p475, %s27, 1
        %p477 = scmp.lt.s32.totalorder %s28, 0
        %s478 = scalar_select %p477, %s28, 0
        %s479 = sadd.s32 %s478, %s476
        %s480 = smul.addr %s479, 8
        %s481 = scalar_lea.vmem %s5, %s480
        // Predicated region
        $region37: #{tpu_custom_call.1} parent=31 // pred_check
          %p482 = pneg %p125
        $region38: #{tpu_custom_call.1} parent=31 // pred_check_branch
          %484 = sbr.rel (%p482) target = $region40
        $region39: #{tpu_custom_call.1} parent=31 // pred_region
          %s485 = smul.u32 4, %s28
          %s487 = ssub.s32 512, 512
          %488 = vsyncadd %s464, %s487
          %s489 = smul.addr %s27, 4
          %s490 = sadd.s32 %s485, %s489
          %s491 = smul.addr %s490, 128
          %s492 = scalar_lea.hbm %s3, %s491
          %s494 = sshll.u32 %s467, 4
          %s495 = int_to_ptr.vmem [resolvable:$true] %s494
          %497 = dma.vmem_to_hbm [thread:$0]  %s495, 512, %s492, %s464
        $region40: #{tpu_custom_call.1} parent=31 // pred_fallthru
          _
        // Predicated region
        $region41: #{tpu_custom_call.1} parent=31 // pred_check
          %p498 = pneg %p153
        $region42: #{tpu_custom_call.1} parent=31 // pred_check_branch
          %500 = sbr.rel (%p498) target = $region44
        $region43: #{tpu_custom_call.1} parent=31 // pred_region
          _
        $region44: #{tpu_custom_call.1} parent=31 // pred_fallthru
          _
        // Predicated region
        $region45: #{tpu_custom_call.1} parent=31 // pred_check
          %p501 = pneg %p181
        $region46: #{tpu_custom_call.1} parent=31 // pred_check_branch
          %503 = sbr.rel (%p501) target = $region48
        $region47: #{tpu_custom_call.1} parent=31 // pred_region
          _
        $region48: #{tpu_custom_call.1} parent=31 // pred_fallthru
          _
      $region32: #{tpu_custom_call.1} parent=5 // pred_fallthru
        _
      %p504 = scmp.le.s32.totalorder 2, %s18
      // Predicated region
      $region49: #{tpu_custom_call.1} parent=5 // pred_check
        %p505 = pneg %p504
      $region50: #{tpu_custom_call.1} parent=5 // pred_check_branch
        %507 = sbr.rel (%p505) target = $region52
      $region51: #{tpu_custom_call.1} parent=5 // pred_region
        %s508 = ssub.s32 %s18, 2
        // Predicated region
        $region53: #{tpu_custom_call.1} parent=51 // pred_check
          %p509 = pneg %p131
        $region54: #{tpu_custom_call.1} parent=51 // pred_check_branch
          %511 = sbr.rel (%p509) target = $region56
        $region55: #{tpu_custom_call.1} parent=51 // pred_region
          %s512 = sand.u32 %s116, 1
          %s513 = scalar_lea.sflag [#allocation4], %s512
          %s514 = sand.u32 %s116, 1
          %s515 = smul.addr %s514, 32
          %s516 = scalar_lea.vmem [#allocation5], %s515
          %517 = dma.done %s513, 512
        $region56: #{tpu_custom_call.1} parent=51 // pred_fallthru
          _
        // Predicated region
        $region57: #{tpu_custom_call.1} parent=51 // pred_check
          %p518 = pneg %p159
        $region58: #{tpu_custom_call.1} parent=51 // pred_check_branch
          %520 = sbr.rel (%p518) target = $region60
        $region59: #{tpu_custom_call.1} parent=51 // pred_region
          %p521 = scmp.lt.s32.totalorder %s29, 1
          %s522 = scalar_select %p521, %s29, 1
          %p523 = scmp.lt.s32.totalorder %s30, 0
          %s524 = scalar_select %p523, %s30, 0
          %s525 = sadd.s32 %s524, %s522
          %s526 = smul.addr %s525, 8
          %s527 = scalar_lea.vmem %s4, %s526
        $region60: #{tpu_custom_call.1} parent=51 // pred_fallthru
          _
        // Predicated region
        $region61: #{tpu_custom_call.1} parent=51 // pred_check
          %p528 = pneg %p187
        $region62: #{tpu_custom_call.1} parent=51 // pred_check_branch
          %530 = sbr.rel (%p528) target = $region64
        $region63: #{tpu_custom_call.1} parent=51 // pred_region
          %p531 = scmp.lt.s32.totalorder %s29, 1
          %s532 = scalar_select %p531, %s29, 1
          %p533 = scmp.lt.s32.totalorder %s30, 0
          %s534 = scalar_select %p533, %s30, 0
          %s535 = sadd.s32 %s534, %s532
          %s536 = smul.addr %s535, 8
          %s537 = scalar_lea.vmem %s5, %s536
        $region64: #{tpu_custom_call.1} parent=51 // pred_fallthru
          _
      $region52: #{tpu_custom_call.1} parent=5 // pred_fallthru
        _
    $region6: #{tpu_custom_call.1} parent=1 // loop_footer
      %s22 = sadd.s32 1, %s18
    $region7: #{tpu_custom_call.1} parent=1 // loop_footer_branch
      %17 = sbr.rel target = $region3
    $region8: #{tpu_custom_call.1} parent=1 // loop_exit
      _
    %538 = vsyncpa [#allocation3], 1
    %s539 = scalar_lea.sflag [#allocation3], 1
    %540 = vsyncpa %s539, 1
    %541 = vsyncpa [#allocation4], 1
    %s542 = scalar_lea.sflag [#allocation4], 1
    %543 = vsyncpa %s542, 1

</llo_original>
